<compile_context>
chip_gen: v6e
topology: v6e:2x2x1
jax: 0.10.0
libtpu: 0.0.40
codegen_flags: <defaults>
</compile_context>

<pallas_src>
import jax
import jax.numpy as jnp
from jax import lax
from jax.experimental import pallas as pl
from jax.experimental.pallas import tpu as pltpu


def baseline_mlp_kernel(x_ref, w1_ref, b1_ref, w2_ref, b2_ref, w3_ref, b3_ref, o_ref):
    """Whole 2-hidden-layer MLP for one batch tile.

      x_ref : (TB, obs_dim)    observations, native layout (f32 in HBM)
      w1    : (size, obs_dim)  PyTorch-native [out, in]   (compute dtype)
      b1    : (size, 1)        compute dtype
      w2    : (size, size)     compute dtype
      b2    : (size, 1)        f32
      w3    : (size, 1)        f32 column for the VPU/XLU head
      b3    : (1, 1)           f32
      o_ref : (1, TB)          lane-dense output row (f32)
    """
    cdt = w1_ref.dtype
    x = x_ref[...].astype(cdt)                                     # (TB, obs_dim)

    # Layer 1: contract obs_dim of BOTH operands -> (size, TB), batch on lanes.
    h = lax.dot_general(w1_ref[...], x, (((1,), (1,)), ((), ())),
                        preferred_element_type=jnp.float32)
    # Bias + ReLU in the compute dtype (bf16 on v6e/v7x: native VPU, and no extra
    # f32->bf16 cast before layer 2; on v5e cdt == f32 so this path is exact).
    h = jnp.maximum(h.astype(cdt) + b1_ref[...], 0)

    # Layer 2: (size, size) @ (size, TB) -> (size, TB), f32 accumulate.
    h = jnp.dot(w2_ref[...], h, preferred_element_type=jnp.float32)
    h = jnp.maximum(h + b2_ref[...], 0.0)                          # f32, feeds f32 head

    # Output layer size -> 1: VPU multiply + XLU sublane reduce (MXU stays free,
    # result is naturally a lane-dense (1, TB) row).
    out = jnp.sum(h * w3_ref[...], axis=0, keepdims=True) + b3_ref[...]
    o_ref[...] = out.astype(o_ref.dtype)


def _default_compute_dtype():
    """bf16 MXU/VPU operands on v6e/v7x (native bf16 VPU); f32 elsewhere (v5e & co)."""
    try:
        kind = jax.devices()[0].device_kind.lower()
    except Exception:
        return jnp.float32
    return jnp.bfloat16 if ("v6" in kind or "v7" in kind) else jnp.float32


def prepare_params(params, compute_dtype=None):
    """One-time weight preprocessing (hoisted out of the per-call forward path).

    params: PyTorch-native shapes
        w1 [size, obs_dim], b1 [size], w2 [size, size], b2 [size], w3 [1, size], b3 [1]
    """
    if compute_dtype is None:
        compute_dtype = _default_compute_dtype()
    w1, b1, w2, b2, w3, b3 = params
    size = w1.shape[0]
    return (
        w1.astype(compute_dtype),                    # (size, obs_dim)
        b1.reshape(size, 1).astype(compute_dtype),   # (size, 1)
        w2.astype(compute_dtype),                    # (size, size)
        b2.reshape(size, 1).astype(jnp.float32),     # (size, 1)
        w3.reshape(size, 1).astype(jnp.float32),     # (size, 1) head column
        b3.reshape(1, 1).astype(jnp.float32),        # (1, 1)
    )


def baseline_forward(observations, prepared_params, *, tb_cap=8192):
    """JAX wrapper for BaselineNetwork.forward.

    observations: [batch, obs_dim] float32
    prepared_params: output of prepare_params (dtype/layout-preprocessed weights).
    returns: [batch] float32 predicted baseline values.

    NOTE: the default compute dtype deviates from PyTorch f32 on v6e/v7x (bf16 MXU
    operands, f32 accumulate).  Pass prepare_params(..., compute_dtype=jnp.float32)
    for bit-comparable baselines.
    """
    w1c, b1c, w2c, b2c, w3c, b3c = prepared_params
    batch, obs_dim = observations.shape

    # Batch tile = lane width of the output row.
    #   * batch <= tb_cap: single tile (block dims == full array dims, so no alignment
    #     constraint, and splitting a tiny problem is pure per-step overhead).
    #   * batch  > tb_cap: lane-aligned tb_cap tiles -> >=2 grid steps, so the
    #     "parallel" axis shards across both v7x TensorCores and the DMA pipeline has
    #     steps to overlap; the ragged tail block is handled by Pallas.
    # TODO(synk): sweep tb_cap in 8192..32768 per TPU generation (re-budget VMEM on v7x).
    TB = batch if batch <= tb_cap else tb_cap
    n_tiles = pl.cdiv(batch, TB)

    resident = lambda a: pl.BlockSpec(a.shape, lambda i: (0, 0))  # weights: one block, all steps

    out = pl.pallas_call(
        baseline_mlp_kernel,
        out_shape=jax.ShapeDtypeStruct((1, batch), jnp.float32),
        grid=(n_tiles,),
        in_specs=[
            pl.BlockSpec((TB, obs_dim), lambda i: (i, 0)),   # obs tile, native layout
            resident(w1c), resident(b1c),
            resident(w2c), resident(b2c),
            resident(w3c), resident(b3c),
        ],
        out_specs=pl.BlockSpec((1, TB), lambda i: (0, i)),   # lane-dense output row
        compiler_params=pltpu.CompilerParams(
            dimension_semantics=("parallel",),               # megacore-shard the batch axis
            vmem_limit_bytes=32 * 1024 * 1024,               # headroom incl. v7x's 64 MiB VMEM
        ),
    )(observations, w1c, b1c, w2c, b2c, w3c, b3c)

    values = out[0]                     # [batch]
    assert values.ndim == 1             # BaselineNetwork.forward contract
    return values


def init_params(key, obs_dim, size, n_layers=2):
    """PyTorch-native parameters mirroring build_mlp(obs_dim, 1, n_layers, size)."""
    # TODO(synk): generalize kernel to arbitrary n_layers (specialized to 2 hidden layers).
    assert n_layers == 2, "kernel is specialized to n_layers=2 hidden layers"
    k1, k2, k3 = jax.random.split(key, 3)
    w1 = jax.random.normal(k1, (size, obs_dim), jnp.float32) * 0.1
    b1 = jnp.zeros((size,), jnp.float32)
    w2 = jax.random.normal(k2, (size, size), jnp.float32) * 0.1
    b2 = jnp.zeros((size,), jnp.float32)
    w3 = jax.random.normal(k3, (1, size), jnp.float32) * 0.1
    b3 = jnp.zeros((1,), jnp.float32)
    return (w1, b1, w2, b2, w3, b3)


def reference_forward(observations, params):
    """Pure-JAX f32 reference with exact PyTorch nn.Linear semantics."""
    w1, b1, w2, b2, w3, b3 = params
    h = jnp.maximum(observations @ w1.T + b1, 0.0)
    h = jnp.maximum(h @ w2.T + b2, 0.0)
    return (h @ w3.T + b3).squeeze(-1)


if __name__ == "__main__":
    key = jax.random.PRNGKey(0)
    k_obs, k_par, k_obs2 = jax.random.split(key, 3)

    batch, obs_dim, hidden = 8, 16, 32     # small shapes consistent with the module
    observations = jax.random.normal(k_obs, (batch, obs_dim), jnp.float32)
    params = init_params(k_par, obs_dim, hidden, n_layers=2)
    ref = reference_forward(observations, params)

    fwd = jax.jit(baseline_forward, static_argnames=("tb_cap",))

    # Exact-semantics path (f32 compute): must match the PyTorch math tightly.
    prepared_f32 = prepare_params(params, compute_dtype=jnp.float32)
    vals_f32 = fwd(observations, prepared_f32)
    jax.block_until_ready(vals_f32)
    assert vals_f32.shape == (batch,)
    assert jnp.allclose(vals_f32, ref, atol=1e-5, rtol=1e-5)

    # Default path (bf16 on v6e/v7x, f32 on v5e/other): loose sanity check.
    prepared = prepare_params(params)
    vals = fwd(observations, prepared)
    jax.block_until_ready(vals)
    assert vals.shape == (batch,)
    assert jnp.allclose(vals, ref, atol=5e-2, rtol=5e-2)

    # Multi-tile + ragged-tail path (TB < batch, batch % TB != 0), exact f32.
    batch2 = 300
    obs2 = jax.random.normal(k_obs2, (batch2, obs_dim), jnp.float32)
    ref2 = reference_forward(obs2, params)
    vals2 = fwd(obs2, prepared_f32, tb_cap=128)
    jax.block_until_ready(vals2)
    assert vals2.shape == (batch2,)
    assert jnp.allclose(vals2, ref2, atol=1e-5, rtol=1e-5)

    print("KERNEL_OK")
</pallas_src>

<mosaic_0001>
module attributes {stable_mosaic.version = 11 : i64} {
  func.func @baseline_mlp_kernel(%arg0: i32, %arg1: memref<8x16xf32, #tpu.memory_space<vmem>>, %arg2: memref<32x16xf32, #tpu.memory_space<vmem>>, %arg3: memref<32x1xf32, #tpu.memory_space<vmem>>, %arg4: memref<32x32xf32, #tpu.memory_space<vmem>>, %arg5: memref<32x1xf32, #tpu.memory_space<vmem>>, %arg6: memref<32x1xf32, #tpu.memory_space<vmem>>, %arg7: memref<1x1xf32, #tpu.memory_space<vmem>>, %arg8: memref<1x8xf32, #tpu.memory_space<vmem>>) attributes {dimension_semantics = [#tpu.dimension_semantics<parallel>], iteration_bounds = array<i64: 1>, scalar_prefetch = 0 : i64, scratch_operands = 0 : i64, tpu.core_type = #tpu.core_type<tc>, window_params = [{transform_indices = @transform_0, window_bounds = array<i64: 8, 16>}, {pipeline_mode = #tpu.pipeline_mode<synchronous>, transform_indices = @transform_1, window_bounds = array<i64: 32, 16>}, {pipeline_mode = #tpu.pipeline_mode<synchronous>, transform_indices = @transform_2, window_bounds = array<i64: 32, 1>}, {pipeline_mode = #tpu.pipeline_mode<synchronous>, transform_indices = @transform_3, window_bounds = array<i64: 32, 32>}, {pipeline_mode = #tpu.pipeline_mode<synchronous>, transform_indices = @transform_4, window_bounds = array<i64: 32, 1>}, {pipeline_mode = #tpu.pipeline_mode<synchronous>, transform_indices = @transform_5, window_bounds = array<i64: 32, 1>}, {pipeline_mode = #tpu.pipeline_mode<synchronous>, transform_indices = @transform_6, window_bounds = array<i64: 1, 1>}, {transform_indices = @transform_7, window_bounds = array<i64: 1, 8>}]} {
    %c0 = arith.constant 0 : index
    %c0_0 = arith.constant 0 : index
    %0 = vector.load %arg1[%c0, %c0_0] : memref<8x16xf32, #tpu.memory_space<vmem>>, vector<8x16xf32>
    %c0_1 = arith.constant 0 : index
    %c0_2 = arith.constant 0 : index
    %1 = vector.load %arg2[%c0_1, %c0_2] : memref<32x16xf32, #tpu.memory_space<vmem>>, vector<32x16xf32>
    %cst = arith.constant dense<0.000000e+00> : vector<32x8xf32>
    %2 = tpu.matmul %1, %0, %cst {dimension_numbers = #tpu.dot_dimension_numbers<[1], [1], [0], [0], [0, 0, 1, 0], [], []>} : vector<32x16xf32>, vector<8x16xf32>, vector<32x8xf32> -> vector<32x8xf32>
    %c0_3 = arith.constant 0 : index
    %c0_4 = arith.constant 0 : index
    %3 = vector.load %arg3[%c0_3, %c0_4] : memref<32x1xf32, #tpu.memory_space<vmem>>, vector<32x1xf32>
    %4 = vector.broadcast %3 : vector<32x1xf32> to vector<32x8xf32>
    %5 = arith.addf %2, %4 : vector<32x8xf32>
    %cst_5 = arith.constant 0.000000e+00 : f32
    %6 = vector.broadcast %cst_5 : f32 to vector<32x8xf32>
    %7 = arith.maximumf %5, %6 : vector<32x8xf32>
    %c0_6 = arith.constant 0 : index
    %c0_7 = arith.constant 0 : index
    %8 = vector.load %arg4[%c0_6, %c0_7] : memref<32x32xf32, #tpu.memory_space<vmem>>, vector<32x32xf32>
    %cst_8 = arith.constant dense<0.000000e+00> : vector<32x8xf32>
    %9 = tpu.matmul %8, %7, %cst_8 {dimension_numbers = #tpu.dot_dimension_numbers<[1], [0], [0], [1], [0, 0, 1, 1], [], []>} : vector<32x32xf32>, vector<32x8xf32>, vector<32x8xf32> -> vector<32x8xf32>
    %c0_9 = arith.constant 0 : index
    %c0_10 = arith.constant 0 : index
    %10 = vector.load %arg5[%c0_9, %c0_10] : memref<32x1xf32, #tpu.memory_space<vmem>>, vector<32x1xf32>
    %11 = vector.broadcast %10 : vector<32x1xf32> to vector<32x8xf32>
    %12 = arith.addf %9, %11 : vector<32x8xf32>
    %cst_11 = arith.constant 0.000000e+00 : f32
    %13 = vector.broadcast %cst_11 : f32 to vector<32x8xf32>
    %14 = arith.maximumf %12, %13 : vector<32x8xf32>
    %c0_12 = arith.constant 0 : index
    %c0_13 = arith.constant 0 : index
    %15 = vector.load %arg6[%c0_12, %c0_13] : memref<32x1xf32, #tpu.memory_space<vmem>>, vector<32x1xf32>
    %16 = vector.broadcast %15 : vector<32x1xf32> to vector<32x8xf32>
    %17 = arith.mulf %14, %16 : vector<32x8xf32>
    %cst_14 = arith.constant dense<0.000000e+00> : vector<8xf32>
    %18 = vector.multi_reduction <add>, %17, %cst_14 [0] : vector<32x8xf32> to vector<8xf32>
    %19 = vector.shape_cast %18 : vector<8xf32> to vector<1x8xf32>
    %c0_15 = arith.constant 0 : index
    %c0_16 = arith.constant 0 : index
    %20 = vector.load %arg7[%c0_15, %c0_16] : memref<1x1xf32, #tpu.memory_space<vmem>>, vector<1x1xf32>
    %21 = vector.broadcast %20 : vector<1x1xf32> to vector<1x8xf32>
    %22 = arith.addf %19, %21 : vector<1x8xf32>
    %c0_17 = arith.constant 0 : index
    %c0_18 = arith.constant 0 : index
    %23 = vector.load %arg8[%c0_17, %c0_18] : memref<1x8xf32, #tpu.memory_space<vmem>>, vector<1x8xf32>
    tpu.vector_store %arg8[%c0_17, %c0_18], %22 {strides = array<i32>} : memref<1x8xf32, #tpu.memory_space<vmem>>, vector<1x8xf32>,
    return
  }
  func.func @transform_0(%arg0: i32) -> (i32, i32) {
    %c0_i32 = arith.constant 0 : i32
    %c0_i32_0 = arith.constant 0 : i32
    return %arg0, %c0_i32 : i32, i32
  }
  func.func @transform_1(%arg0: i32) -> (i32, i32) {
    %c0_i32 = arith.constant 0 : i32
    %c0_i32_0 = arith.constant 0 : i32
    %c0_i32_1 = arith.constant 0 : i32
    return %c0_i32, %c0_i32_0 : i32, i32
  }
  func.func @transform_2(%arg0: i32) -> (i32, i32) {
    %c0_i32 = arith.constant 0 : i32
    %c0_i32_0 = arith.constant 0 : i32
    %c0_i32_1 = arith.constant 0 : i32
    return %c0_i32, %c0_i32_0 : i32, i32
  }
  func.func @transform_3(%arg0: i32) -> (i32, i32) {
    %c0_i32 = arith.constant 0 : i32
    %c0_i32_0 = arith.constant 0 : i32
    %c0_i32_1 = arith.constant 0 : i32
    return %c0_i32, %c0_i32_0 : i32, i32
  }
  func.func @transform_4(%arg0: i32) -> (i32, i32) {
    %c0_i32 = arith.constant 0 : i32
    %c0_i32_0 = arith.constant 0 : i32
    %c0_i32_1 = arith.constant 0 : i32
    return %c0_i32, %c0_i32_0 : i32, i32
  }
  func.func @transform_5(%arg0: i32) -> (i32, i32) {
    %c0_i32 = arith.constant 0 : i32
    %c0_i32_0 = arith.constant 0 : i32
    %c0_i32_1 = arith.constant 0 : i32
    return %c0_i32, %c0_i32_0 : i32, i32
  }
  func.func @transform_6(%arg0: i32) -> (i32, i32) {
    %c0_i32 = arith.constant 0 : i32
    %c0_i32_0 = arith.constant 0 : i32
    %c0_i32_1 = arith.constant 0 : i32
    return %c0_i32, %c0_i32_0 : i32, i32
  }
  func.func @transform_7(%arg0: i32) -> (i32, i32) {
    %c0_i32 = arith.constant 0 : i32
    %c0_i32_0 = arith.constant 0 : i32
    return %c0_i32, %arg0 : i32, i32
  }
}

</mosaic_0001>

<llo_original>
// kernel: baseline_forward.1
$region0: #{baseline_forward.1}
  #allocation0 [shape = 'u32[]', space=smem, size = 0x4, offset = 0x4, fixed_abs, tag = 'smem constant byte address 0x4 - core index']
  #allocation1 [shape = 'u32[144,128]{1,0:T(1,128)}', space=vmem, size = 0x12000, scoped, tag = 'internal scratch']
  #allocation2 [shape = 'f32[1,1]{1,0:T(1,128)S(1)}', space=vmem, size = 0x200, scoped, tag = 'scoped memory for baseline_forward.1']
  %s0 = inlined_call_operand.vmem [shape: f32[8,16], index: 0, kind: input, shape index: {}]
  %s1 = inlined_call_operand.vmem [shape: f32[32,16], index: 1, kind: input, shape index: {}]
  %s2 = inlined_call_operand.vmem [shape: f32[32,1], index: 2, kind: input, shape index: {}]
  %s3 = inlined_call_operand.vmem [shape: f32[32,32], index: 3, kind: input, shape index: {}]
  %s4 = inlined_call_operand.vmem [shape: f32[32,1], index: 4, kind: input, shape index: {}]
  %s5 = inlined_call_operand.vmem [shape: f32[32,1], index: 5, kind: input, shape index: {}]
  %s6 = inlined_call_operand.<no memory space> [shape: f32[1,1], index: 6, kind: input, shape index: {}]
  %s7 = inlined_call_operand.hbm [shape: f32[1,8], index: 7, kind: output, shape index: {}]
  %s8 = sld [smem:[#allocation0]]
  $region38: #{baseline_forward.1} parent=0
    _
  %s10 = ssub.s32 1, %s8
  %s11 = scalar_select 0, %s10, %s8
  %v12 = vstv %s6
  %13 = vst [vmem:[#allocation2] sm:$0x1] %v12
  $region1: #{baseline_forward.1} parent=0
    #allocation3 [shape = 'u8[512]{0}', space=vmem, size = 0x400, scoped, tag = 'output window, operand 0, single buffered']
    #allocation4 [shape = 's32[1]{0}', space=sflag, size = 0x4, scoped, tag = 'scoped memory for baseline_forward.1']
    %14 = vsyncpa [#allocation4], 0
    // Predicated region
    $region2: #{baseline_forward.1} parent=1 // pred_check
      _
    $region3: #{baseline_forward.1} parent=1 // pred_check_branch
      %16 = sbr.rel (0) target = $region5
    $region4: #{baseline_forward.1} parent=1 // pred_region
      _
    $region5: #{baseline_forward.1} parent=1 // pred_fallthru
      _
    // Predicated region
    $region6: #{baseline_forward.1} parent=1 // pred_check
      _
    $region7: #{baseline_forward.1} parent=1 // pred_check_branch
      %18 = sbr.rel (0) target = $region9
    $region8: #{baseline_forward.1} parent=1 // pred_region
      _
    $region9: #{baseline_forward.1} parent=1 // pred_fallthru
      _
    // Predicated region
    $region10: #{baseline_forward.1} parent=1 // pred_check
      _
    $region11: #{baseline_forward.1} parent=1 // pred_check_branch
      %20 = sbr.rel (0) target = $region13
    $region12: #{baseline_forward.1} parent=1 // pred_region
      _
    $region13: #{baseline_forward.1} parent=1 // pred_fallthru
      _
    // Predicated region
    $region14: #{baseline_forward.1} parent=1 // pred_check
      _
    $region15: #{baseline_forward.1} parent=1 // pred_check_branch
      %22 = sbr.rel (0) target = $region17
    $region16: #{baseline_forward.1} parent=1 // pred_region
      _
    $region17: #{baseline_forward.1} parent=1 // pred_fallthru
      _
    // Predicated region
    $region18: #{baseline_forward.1} parent=1 // pred_check
      _
    $region19: #{baseline_forward.1} parent=1 // pred_check_branch
      %24 = sbr.rel (0) target = $region21
    $region20: #{baseline_forward.1} parent=1 // pred_region
      _
    $region21: #{baseline_forward.1} parent=1 // pred_fallthru
      _
    // Predicated region
    $region22: #{baseline_forward.1} parent=1 // pred_check
      _
    $region23: #{baseline_forward.1} parent=1 // pred_check_branch
      %26 = sbr.rel (0) target = $region25
    $region24: #{baseline_forward.1} parent=1 // pred_region
      _
    $region25: #{baseline_forward.1} parent=1 // pred_fallthru
      _
    // Predicated region
    $region26: #{baseline_forward.1} parent=1 // pred_check
      _
    $region27: #{baseline_forward.1} parent=1 // pred_check_branch
      %28 = sbr.rel (0) target = $region29
    $region28: #{baseline_forward.1} parent=1 // pred_region
      _
    $region29: #{baseline_forward.1} parent=1 // pred_fallthru
      _
    %v29 = vld [vmem:[%s0] sm:$0xff]
    %v30 = vld [vmem:[%s1] sm:$0xff]
    %v31 = vld [vmem:[%s1 + $0x8] sm:$0xff]
    %v32 = vld [vmem:[%s1 + $0x10] sm:$0xff]
    %v33 = vld [vmem:[%s1 + $0x18] sm:$0xff]
    %v34 = vld [vmem:[%s2] sm:$0xff]
    %v35 = vld [vmem:[%s2 + $0x8] sm:$0xff]
    %v36 = vld [vmem:[%s2 + $0x10] sm:$0xff]
    %v37 = vld [vmem:[%s2 + $0x18] sm:$0xff]
    %39 = vset.pattern.permute.xlu0 0
    %40 = vperm.xlu0 %39, %v34
    %v41 = vpop.permute.xlu0 %40
    %44 = vset.pattern.permute.xlu0 0
    %45 = vperm.xlu0 %44, %v35
    %v46 = vpop.permute.xlu0 %45
    %49 = vset.pattern.permute.xlu0 0
    %50 = vperm.xlu0 %49, %v36
    %v51 = vpop.permute.xlu0 %50
    %54 = vset.pattern.permute.xlu0 0
    %55 = vperm.xlu0 %54, %v37
    %v56 = vpop.permute.xlu0 %55
    %vm58 = vcmask 130048
    %v60 = vsel %vm58, %v30, 0
    %v63 = vsel %vm58, %v31, 0
    %v66 = vsel %vm58, %v32, 0
    %v69 = vsel %vm58, %v33, 0
    %v72 = vsel %vm58, %v29, 0
    %74 = vmatprep.subr.mxu0 0.0
    %75 = vmatpush1.xpose.msra.mxu0 0.0
    %76 = vmatprep.subr.mxu0 0.0
    %77 = vmatpush1.xpose.msra.mxu0 0.0
    %78 = vmatprep.subr.mxu0 0.0
    %79 = vmatpush1.xpose.msra.mxu0 0.0
    %80 = vmatprep.subr.mxu0 0.0
    %81 = vmatpush1.xpose.msra.mxu0 0.0
    %82 = vmatprep.subr.mxu0 0.0
    %83 = vmatpush1.xpose.msra.mxu0 0.0
    %84 = vmatprep.subr.mxu0 0.0
    %85 = vmatpush1.xpose.msra.mxu0 0.0
    %86 = vmatprep.subr.mxu0 0.0
    %87 = vmatpush1.xpose.msra.mxu0 0.0
    %88 = vmatprep.subr.mxu0 0.0
    %89 = vmatpush1.xpose.msra.mxu0 0.0
    %90 = vmatprep.subr.mxu0 0.0
    %91 = vmatpush1.xpose.msra.mxu0 0.0
    %92 = vmatprep.subr.mxu0 0.0
    %93 = vmatpush1.xpose.msra.mxu0 0.0
    %94 = vmatprep.subr.mxu0 0.0
    %95 = vmatpush1.xpose.msra.mxu0 0.0
    %96 = vmatprep.subr.mxu0 0.0
    %97 = vmatpush1.xpose.msra.mxu0 0.0
    %98 = vmatprep.subr.mxu0 0.0
    %99 = vmatpush1.xpose.msra.mxu0 0.0
    %100 = vmatprep.subr.mxu0 0.0
    %101 = vmatpush1.xpose.msra.mxu0 0.0
    %102 = vmatprep.subr.mxu0 0.0
    %103 = vmatpush1.xpose.msra.mxu0 0.0
    %104 = vmatprep.subr.mxu0 0.0
    %105 = vmatpush1.xpose.msra.mxu0 %v72
    %106 = vmatprep.subr.mxu0 0.0
    %107 = vmatpush2.xpose.msra.mxu0 0.0
    %108 = vmatprep.subr.mxu0 0.0
    %109 = vmatpush2.xpose.msra.mxu0 0.0
    %110 = vmatprep.subr.mxu0 0.0
    %111 = vmatpush2.xpose.msra.mxu0 0.0
    %112 = vmatprep.subr.mxu0 0.0
    %113 = vmatpush2.xpose.msra.mxu0 0.0
    %114 = vmatprep.subr.mxu0 0.0
    %115 = vmatpush2.xpose.msra.mxu0 0.0
    %116 = vmatprep.subr.mxu0 0.0
    %117 = vmatpush2.xpose.msra.mxu0 0.0
    %118 = vmatprep.subr.mxu0 0.0
    %119 = vmatpush2.xpose.msra.mxu0 0.0
    %120 = vmatprep.subr.mxu0 0.0
    %121 = vmatpush2.xpose.msra.mxu0 0.0
    %122 = vmatprep.subr.mxu0 0.0
    %123 = vmatpush2.xpose.msra.mxu0 0.0
    %124 = vmatprep.subr.mxu0 0.0
    %125 = vmatpush2.xpose.msra.mxu0 0.0
    %126 = vmatprep.subr.mxu0 0.0
    %127 = vmatpush2.xpose.msra.mxu0 0.0
    %128 = vmatprep.subr.mxu0 0.0
    %129 = vmatpush2.xpose.msra.mxu0 0.0
    %130 = vmatprep.subr.mxu0 0.0
    %131 = vmatpush2.xpose.msra.mxu0 0.0
    %132 = vmatprep.subr.mxu0 0.0
    %133 = vmatpush2.xpose.msra.mxu0 0.0
    %134 = vmatprep.subr.mxu0 0.0
    %135 = vmatpush2.xpose.msra.mxu0 0.0
    %136 = vmatprep.subr.mxu0 0.0
    %137 = vmatpush2.xpose.msra.mxu0 0.0
    %138 = vmatprep.mubr.f32.mxu0 0.0
    %139 = vmatmul.mubr.f32.gmra.mxu0 %v60
    %v140 = vpop.f32.mrf.mxu0
    %v141 = vadd.f32 %v41, %v140
    %v142 = vpop.f32.mrf.mxu0
    %143 = vmatprep.mubr.f32.mxu0 0.0
    %144 = vmatmul.mubr.f32.gmra.mxu0 %v63
    %v145 = vpop.f32.mrf.mxu0
    %v146 = vadd.f32 %v46, %v145
    %v147 = vpop.f32.mrf.mxu0
    %148 = vmatprep.mubr.f32.mxu0 0.0
    %149 = vmatmul.mubr.f32.gmra.mxu0 %v66
    %v150 = vpop.f32.mrf.mxu0
    %v151 = vadd.f32 %v51, %v150
    %v152 = vpop.f32.mrf.mxu0
    %153 = vmatprep.mubr.f32.mxu0 0.0
    %154 = vmatmul.mubr.f32.gmra.mxu0 %v69
    %v155 = vpop.f32.mrf.mxu0
    %v156 = vadd.f32 %v56, %v155
    %v157 = vpop.f32.mrf.mxu0
    %158 = vdwg.mxu0
    %v159 = vmax.f32 %v141, 0.0
    %v160 = vmax.f32 %v146, 0.0
    %v161 = vmax.f32 %v151, 0.0
    %v162 = vmax.f32 %v156, 0.0
    %v163 = vld [vmem:[%s3] sm:$0xff]
    %v164 = vld [vmem:[%s3 + $0x8] sm:$0xff]
    %v165 = vld [vmem:[%s3 + $0x10] sm:$0xff]
    %v166 = vld [vmem:[%s3 + $0x18] sm:$0xff]
    %v167 = vld [vmem:[%s4] sm:$0xff]
    %v168 = vld [vmem:[%s4 + $0x8] sm:$0xff]
    %v169 = vld [vmem:[%s4 + $0x10] sm:$0xff]
    %v170 = vld [vmem:[%s4 + $0x18] sm:$0xff]
    %172 = vset.pattern.permute.xlu0 0
    %173 = vperm.xlu0 %172, %v167
    %v174 = vpop.permute.xlu0 %173
    %177 = vset.pattern.permute.xlu0 0
    %178 = vperm.xlu0 %177, %v168
    %v179 = vpop.permute.xlu0 %178
    %182 = vset.pattern.permute.xlu0 0
    %183 = vperm.xlu0 %182, %v169
    %v184 = vpop.permute.xlu0 %183
    %187 = vset.pattern.permute.xlu0 0
    %188 = vperm.xlu0 %187, %v170
    %v189 = vpop.permute.xlu0 %188
    %vm191 = vcmask 261120
    %v193 = vsel %vm191, %v163, 0
    %v196 = vsel %vm191, %v164, 0
    %v199 = vsel %vm191, %v165, 0
    %v202 = vsel %vm191, %v166, 0
    %204 = vmatprep.subr.mxu0 0.0
    %205 = vmatpush1.msra.mxu0 0.0
    %206 = vmatprep.subr.mxu0 0.0
    %207 = vmatpush1.msra.mxu0 0.0
    %208 = vmatprep.subr.mxu0 0.0
    %209 = vmatpush1.msra.mxu0 0.0
    %210 = vmatprep.subr.mxu0 0.0
    %211 = vmatpush1.msra.mxu0 0.0
    %212 = vmatprep.subr.mxu0 0.0
    %213 = vmatpush1.msra.mxu0 0.0
    %214 = vmatprep.subr.mxu0 0.0
    %215 = vmatpush1.msra.mxu0 0.0
    %216 = vmatprep.subr.mxu0 0.0
    %217 = vmatpush1.msra.mxu0 0.0
    %218 = vmatprep.subr.mxu0 0.0
    %219 = vmatpush1.msra.mxu0 0.0
    %220 = vmatprep.subr.mxu0 0.0
    %221 = vmatpush1.msra.mxu0 0.0
    %222 = vmatprep.subr.mxu0 0.0
    %223 = vmatpush1.msra.mxu0 0.0
    %224 = vmatprep.subr.mxu0 0.0
    %225 = vmatpush1.msra.mxu0 0.0
    %226 = vmatprep.subr.mxu0 0.0
    %227 = vmatpush1.msra.mxu0 0.0
    %228 = vmatprep.subr.mxu0 0.0
    %229 = vmatpush1.msra.mxu0 %v162
    %230 = vmatprep.subr.mxu0 0.0
    %231 = vmatpush1.msra.mxu0 %v161
    %232 = vmatprep.subr.mxu0 0.0
    %233 = vmatpush1.msra.mxu0 %v160
    %234 = vmatprep.subr.mxu0 0.0
    %235 = vmatpush1.msra.mxu0 %v159
    %236 = vmatprep.subr.mxu0 0.0
    %237 = vmatpush2.msra.mxu0 0.0
    %238 = vmatprep.subr.mxu0 0.0
    %239 = vmatpush2.msra.mxu0 0.0
    %240 = vmatprep.subr.mxu0 0.0
    %241 = vmatpush2.msra.mxu0 0.0
    %242 = vmatprep.subr.mxu0 0.0
    %243 = vmatpush2.msra.mxu0 0.0
    %244 = vmatprep.subr.mxu0 0.0
    %245 = vmatpush2.msra.mxu0 0.0
    %246 = vmatprep.subr.mxu0 0.0
    %247 = vmatpush2.msra.mxu0 0.0
    %248 = vmatprep.subr.mxu0 0.0
    %249 = vmatpush2.msra.mxu0 0.0
    %250 = vmatprep.subr.mxu0 0.0
    %251 = vmatpush2.msra.mxu0 0.0
    %252 = vmatprep.subr.mxu0 0.0
    %253 = vmatpush2.msra.mxu0 0.0
    %254 = vmatprep.subr.mxu0 0.0
    %255 = vmatpush2.msra.mxu0 0.0
    %256 = vmatprep.subr.mxu0 0.0
    %257 = vmatpush2.msra.mxu0 0.0
    %258 = vmatprep.subr.mxu0 0.0
    %259 = vmatpush2.msra.mxu0 0.0
    %260 = vmatprep.subr.mxu0 0.0
    %261 = vmatpush2.msra.mxu0 0.0
    %262 = vmatprep.subr.mxu0 0.0
    %263 = vmatpush2.msra.mxu0 0.0
    %264 = vmatprep.subr.mxu0 0.0
    %265 = vmatpush2.msra.mxu0 0.0
    %266 = vmatprep.subr.mxu0 0.0
    %267 = vmatpush2.msra.mxu0 0.0
    %268 = vmatprep.mubr.f32.mxu0 0.0
    %269 = vmatmul.mubr.f32.gmra.mxu0 %v193
    %v270 = vpop.f32.mrf.mxu0
    %v271 = vadd.f32 %v174, %v270
    %v272 = vpop.f32.mrf.mxu0
    %273 = vmatprep.mubr.f32.mxu0 0.0
    %274 = vmatmul.mubr.f32.gmra.mxu0 %v196
    %v275 = vpop.f32.mrf.mxu0
    %v276 = vadd.f32 %v179, %v275
    %v277 = vpop.f32.mrf.mxu0
    %278 = vmatprep.mubr.f32.mxu0 0.0
    %279 = vmatmul.mubr.f32.gmra.mxu0 %v199
    %v280 = vpop.f32.mrf.mxu0
    %v281 = vadd.f32 %v184, %v280
    %v282 = vpop.f32.mrf.mxu0
    %283 = vmatprep.mubr.f32.mxu0 0.0
    %284 = vmatmul.mubr.f32.gmra.mxu0 %v202
    %v285 = vpop.f32.mrf.mxu0
    %v286 = vadd.f32 %v189, %v285
    %v287 = vpop.f32.mrf.mxu0
    %288 = vdwg.mxu0
    %v289 = vmax.f32 %v271, 0.0
    %v290 = vmax.f32 %v276, 0.0
    %v291 = vmax.f32 %v281, 0.0
    %v292 = vmax.f32 %v286, 0.0
    %v293 = vld [vmem:[%s5] sm:$0xff]
    %v294 = vld [vmem:[%s5 + $0x8] sm:$0xff]
    %v295 = vld [vmem:[%s5 + $0x10] sm:$0xff]
    %v296 = vld [vmem:[%s5 + $0x18] sm:$0xff]
    %298 = vset.pattern.permute.xlu0 0
    %299 = vperm.xlu0 %298, %v293
    %v300 = vpop.permute.xlu0 %299
    %303 = vset.pattern.permute.xlu0 0
    %304 = vperm.xlu0 %303, %v294
    %v305 = vpop.permute.xlu0 %304
    %308 = vset.pattern.permute.xlu0 0
    %309 = vperm.xlu0 %308, %v295
    %v310 = vpop.permute.xlu0 %309
    %313 = vset.pattern.permute.xlu0 0
    %314 = vperm.xlu0 %313, %v296
    %v315 = vpop.permute.xlu0 %314
    %v317 = vmul.f32 %v289, %v300
    %v318 = vmul.f32 %v290, %v305
    %v319 = vmul.f32 %v291, %v310
    %v320 = vmul.f32 %v292, %v315
    %vm321 = vcmask 64512
    %v322 = vsel %vm321, %v317, 0.0
    %v323 = vsel %vm321, %v318, 0.0
    %v324 = vadd.f32 %v322, %v323
    %v325 = vsel %vm321, %v319, 0.0
    %v326 = vadd.f32 %v324, %v325
    %v327 = vsel %vm321, %v320, 0.0
    %v328 = vadd.f32 %v326, %v327
    %v329 = vrot.slane %v328, 4
    %v330 = vadd.f32 %v328, %v329
    %v331 = vrot.slane %v330, 2
    %v332 = vadd.f32 %v330, %v331
    %v333 = vrot.slane %v332, 1
    %v334 = vadd.f32 %v332, %v333
    %v335 = vld [vmem:[#allocation2] sm:$0x1]
    %337 = vset.pattern.permute.xlu0 0
    %338 = vperm.xlu0 %337, %v335
    %v339 = vpop.permute.xlu0 %338
    %v341 = vlaneseq
    %v342 = vshrl.u32 %v341, 7
    %v343 = vsub.s32 0, %v342
    %v344 = vrot.slane %v339, %v343
    %v345 = vadd.f32 %v334, %v344
    %vm346 = vcmask 57344
    %347 = vst.msk [vmem:[#allocation3] sm:$0x1] %vm346, %v345
    // Predicated region
    $region30: #{baseline_forward.1} parent=1 // pred_check
      _
    $region31: #{baseline_forward.1} parent=1 // pred_check_branch
      %349 = sbr.rel (0) target = $region33
    $region32: #{baseline_forward.1} parent=1 // pred_region
      %s351 = ssub.s32 16, 16
      %352 = vsyncadd [#allocation4], %s351
      %s354 = sshll.u32 [#allocation3], 4
      %s355 = int_to_ptr.vmem [resolvable:$true] %s354
      %357 = dma.vmem_to_hbm [thread:$0]  %s355, 16, %s7, [#allocation4]
    $region33: #{baseline_forward.1} parent=1 // pred_fallthru
      _
    // Predicated region
    $region34: #{baseline_forward.1} parent=1 // pred_check
      _
    $region35: #{baseline_forward.1} parent=1 // pred_check_branch
      %359 = sbr.rel (0) target = $region37
    $region36: #{baseline_forward.1} parent=1 // pred_region
      %360 = dma.done [#allocation4], 16
    $region37: #{baseline_forward.1} parent=1 // pred_fallthru
      _
    %361 = vsyncpa [#allocation4], 1

</llo_original>
